<compile_context>
chip_gen: v6e
topology: v6e:2x2x1
jax: 0.10.0
libtpu: 0.0.40
codegen_flags: <defaults>
</compile_context>

<pallas_src>
import functools

import jax
import jax.numpy as jnp
from jax.experimental import pallas as pl
from jax.experimental.pallas import tpu as pltpu


def _layernorm_kernel(x_ref, g_ref, b_ref, o_ref, *, eps):
    # x_ref: (BB, C, TL) block; g_ref, b_ref: (1, C, 1) parameter blocks.
    # Stats accumulate in f32 regardless of input dtype.
    x = x_ref[...].astype(jnp.float32)                       # (BB, C, TL)
    mean = jnp.mean(x, axis=1, keepdims=True)                # (BB, 1, TL)
    xc = x - mean                                            # centered, reused
    var = jnp.mean(xc * xc, axis=1, keepdims=True)           # population var (unbiased=False)
    inv = jax.lax.rsqrt(var + eps)                           # (BB, 1, TL)
    g = g_ref[...].astype(jnp.float32)                       # (1, C, 1)
    b = b_ref[...].astype(jnp.float32)                       # (1, C, 1)
    o_ref[...] = (xc * inv * g + b).astype(o_ref.dtype)


def _choose_tiles(B, C, L, itemsize):
    """Pick (BB, TL) so each block carries multi-MiB of HBM traffic.

    Budget model (per block, worst case):
      DMA buffers : 2 * (in + out) * block_elems * itemsize   (double-buffered)
      f32 temps   : ~3 * block_elems * 4                      (x, xc, y)
    With the targets below this stays ~28-40 MiB, under the 48 MiB limit set
    on the pallas_call (and under v7x's 64 MiB physical VMEM).
    """
    TARGET_HBM_BYTES = 4 * 1024 * 1024        # per-block input bytes target
    MAX_F32_BLOCK_BYTES = 8 * 1024 * 1024     # caps the f32 temporaries
    target_elems = max(
        min(TARGET_HBM_BYTES // itemsize, MAX_F32_BLOCK_BYTES // 4), 1)

    # Lane axis: full L when short, otherwise the largest 128-multiple that
    # fits the budget (lane-dense output blocks -> unmasked stores).
    if L <= 128:
        TL = L
    else:
        max_tl = max(target_elems // max(C, 1), 128)
        TL = min(L, max_tl, 32768)
        if TL < L:
            TL = max(128, (TL // 128) * 128)

    # Batch axis: fold batches into the block until the element budget is hit.
    BB = max(1, min(B, target_elems // max(C * TL, 1)))

    # Keep >= 2 parallel blocks when the problem is big enough to matter
    # (v7x shards "parallel" grid axes across its 2 TensorCores).
    total_bytes = B * C * L * itemsize
    if total_bytes >= (1 << 20) and pl.cdiv(B, BB) * pl.cdiv(L, TL) < 2:
        if B > 1:
            BB = max(1, (B + 1) // 2)
        elif L > 256:
            half = pl.cdiv(L, 2)
            TL = max(128, (half // 128) * 128)
    return BB, TL


def layer_norm(x, g, b, eps=1e-5):
    """x: (B, C, L); g, b: broadcastable to (1, C, 1). Returns (B, C, L)."""
    B, C, L = x.shape
    g3 = g.reshape(1, C, 1)
    b3 = b.reshape(1, C, 1)
    BB, TL = _choose_tiles(B, C, L, x.dtype.itemsize)
    kernel = functools.partial(_layernorm_kernel, eps=eps)
    # NOTE: best HBM efficiency when C is a multiple of the sublane count
    # (8 for f32, 16 for bf16); tiny C (e.g. 4) pays sublane padding but stays
    # correct. Padded tail rows/lanes compute rsqrt on garbage that Pallas
    # discards — benign.
    return pl.pallas_call(
        kernel,
        out_shape=jax.ShapeDtypeStruct((B, C, L), x.dtype),
        grid=(pl.cdiv(B, BB), pl.cdiv(L, TL)),
        in_specs=[
            pl.BlockSpec((BB, C, TL), lambda i, j: (i, 0, j)),
            pl.BlockSpec((1, C, 1), lambda i, j: (0, 0, 0)),
            pl.BlockSpec((1, C, 1), lambda i, j: (0, 0, 0)),
        ],
        out_specs=pl.BlockSpec((BB, C, TL), lambda i, j: (i, 0, j)),
        compiler_params=pltpu.CompilerParams(
            dimension_semantics=("parallel", "parallel"),
            vmem_limit_bytes=48 * 1024 * 1024,
        ),
    )(x, g3, b3)


def layer_norm_ref(x, g, b, eps=1e-5):
    x32 = x.astype(jnp.float32)
    mean = jnp.mean(x32, axis=1, keepdims=True)
    var = jnp.mean((x32 - mean) ** 2, axis=1, keepdims=True)
    y = (x32 - mean) / jnp.sqrt(var + eps) * g.astype(jnp.float32) + b.astype(jnp.float32)
    return y.astype(x.dtype)


if __name__ == "__main__":
    key = jax.random.PRNGKey(0)

    # 1) Small shape consistent with the module (batch=2, channels=4, length=16).
    B, C, L = 2, 4, 16
    x = jax.random.normal(key, (B, C, L), dtype=jnp.float32)
    # Deterministic parameter init (matches nn.Parameter(torch.ones/zeros)).
    g = jnp.ones((1, C, 1), dtype=jnp.float32)
    b = jnp.zeros((1, C, 1), dtype=jnp.float32)
    out = jax.block_until_ready(layer_norm(x, g, b))
    ref = layer_norm_ref(x, g, b)
    assert out.shape == (B, C, L)
    assert jnp.allclose(out, ref, atol=1e-5, rtol=1e-5), "mismatch (small)"

    # 2) Shape that exercises the L-tiled path (TL < L) and a 2x2 grid.
    B2, C2, L2 = 2, 64, 32768
    x2 = jax.random.normal(jax.random.PRNGKey(1), (B2, C2, L2), dtype=jnp.float32)
    g2 = jax.random.normal(jax.random.PRNGKey(2), (1, C2, 1), dtype=jnp.float32)
    b2 = jax.random.normal(jax.random.PRNGKey(3), (1, C2, 1), dtype=jnp.float32)
    out2 = jax.block_until_ready(layer_norm(x2, g2, b2))
    ref2 = layer_norm_ref(x2, g2, b2)
    assert jnp.allclose(out2, ref2, atol=1e-4, rtol=1e-4), "mismatch (L-tiled)"

    # 3) Shape that exercises batch folding with a partial last batch block.
    B3, C3, L3 = 3, 8, 16384
    x3 = jax.random.normal(jax.random.PRNGKey(4), (B3, C3, L3), dtype=jnp.float32)
    g3 = jnp.ones((1, C3, 1), dtype=jnp.float32)
    b3 = jnp.zeros((1, C3, 1), dtype=jnp.float32)
    out3 = jax.block_until_ready(layer_norm(x3, g3, b3))
    ref3 = layer_norm_ref(x3, g3, b3)
    assert jnp.allclose(out3, ref3, atol=1e-4, rtol=1e-4), "mismatch (batch-folded)"

    # 4) bf16 input exercises itemsize-based tile sizing (stats still in f32).
    B4, C4, L4 = 4, 32, 1024
    x4 = jax.random.normal(jax.random.PRNGKey(5), (B4, C4, L4), dtype=jnp.float32).astype(jnp.bfloat16)
    g4 = jnp.ones((1, C4, 1), dtype=jnp.bfloat16)
    b4 = jnp.zeros((1, C4, 1), dtype=jnp.bfloat16)
    out4 = jax.block_until_ready(layer_norm(x4, g4, b4))
    ref4 = layer_norm_ref(x4, g4, b4)
    assert jnp.allclose(out4.astype(jnp.float32), ref4.astype(jnp.float32),
                        atol=2e-2, rtol=2e-2), "mismatch (bf16)"

    print("KERNEL_OK")
</pallas_src>

<mosaic_0001>
module attributes {stable_mosaic.version = 11 : i64} {
  func.func @_layernorm_kernel(%arg0: i32, %arg1: i32, %arg2: memref<2x4x16xf32, #tpu.memory_space<vmem>>, %arg3: memref<1x4x1xf32, #tpu.memory_space<vmem>>, %arg4: memref<1x4x1xf32, #tpu.memory_space<vmem>>, %arg5: memref<2x4x16xf32, #tpu.memory_space<vmem>>) attributes {dimension_semantics = [#tpu.dimension_semantics<parallel>, #tpu.dimension_semantics<parallel>], iteration_bounds = array<i64: 1, 1>, scalar_prefetch = 0 : i64, scratch_operands = 0 : i64, tpu.core_type = #tpu.core_type<tc>, window_params = [{transform_indices = @transform_0, window_bounds = array<i64: 2, 4, 16>}, {pipeline_mode = #tpu.pipeline_mode<synchronous>, transform_indices = @transform_1, window_bounds = array<i64: 1, 4, 1>}, {pipeline_mode = #tpu.pipeline_mode<synchronous>, transform_indices = @transform_2, window_bounds = array<i64: 1, 4, 1>}, {transform_indices = @transform_3, window_bounds = array<i64: 2, 4, 16>}]} {
    %c0 = arith.constant 0 : index
    %c0_0 = arith.constant 0 : index
    %c0_1 = arith.constant 0 : index
    %0 = vector.load %arg2[%c0, %c0_0, %c0_1] : memref<2x4x16xf32, #tpu.memory_space<vmem>>, vector<2x4x16xf32>
    %cst = arith.constant dense<0.000000e+00> : vector<2x16xf32>
    %1 = vector.multi_reduction <add>, %0, %cst [1] : vector<2x4x16xf32> to vector<2x16xf32>
    %2 = vector.shape_cast %1 : vector<2x16xf32> to vector<2x1x16xf32>
    %cst_2 = arith.constant 4.000000e+00 : f32
    %3 = vector.broadcast %cst_2 : f32 to vector<2x1x16xf32>
    %4 = arith.divf %2, %3 : vector<2x1x16xf32>
    %5 = vector.broadcast %4 : vector<2x1x16xf32> to vector<2x4x16xf32>
    %6 = arith.subf %0, %5 : vector<2x4x16xf32>
    %7 = arith.mulf %6, %6 : vector<2x4x16xf32>
    %cst_3 = arith.constant dense<0.000000e+00> : vector<2x16xf32>
    %8 = vector.multi_reduction <add>, %7, %cst_3 [1] : vector<2x4x16xf32> to vector<2x16xf32>
    %9 = vector.shape_cast %8 : vector<2x16xf32> to vector<2x1x16xf32>
    %cst_4 = arith.constant 4.000000e+00 : f32
    %10 = vector.broadcast %cst_4 : f32 to vector<2x1x16xf32>
    %11 = arith.divf %9, %10 : vector<2x1x16xf32>
    %cst_5 = arith.constant 9.99999974E-6 : f32
    %12 = vector.broadcast %cst_5 : f32 to vector<2x1x16xf32>
    %13 = arith.addf %11, %12 : vector<2x1x16xf32>
    %14 = math.rsqrt %13 : vector<2x1x16xf32>
    %c0_6 = arith.constant 0 : index
    %c0_7 = arith.constant 0 : index
    %c0_8 = arith.constant 0 : index
    %15 = vector.load %arg3[%c0_6, %c0_7, %c0_8] : memref<1x4x1xf32, #tpu.memory_space<vmem>>, vector<1x4x1xf32>
    %c0_9 = arith.constant 0 : index
    %c0_10 = arith.constant 0 : index
    %c0_11 = arith.constant 0 : index
    %16 = vector.load %arg4[%c0_9, %c0_10, %c0_11] : memref<1x4x1xf32, #tpu.memory_space<vmem>>, vector<1x4x1xf32>
    %17 = vector.broadcast %14 : vector<2x1x16xf32> to vector<2x4x16xf32>
    %18 = arith.mulf %6, %17 : vector<2x4x16xf32>
    %19 = vector.broadcast %15 : vector<1x4x1xf32> to vector<2x4x16xf32>
    %20 = arith.mulf %18, %19 : vector<2x4x16xf32>
    %21 = vector.broadcast %16 : vector<1x4x1xf32> to vector<2x4x16xf32>
    %22 = arith.addf %20, %21 : vector<2x4x16xf32>
    %c0_12 = arith.constant 0 : index
    %c0_13 = arith.constant 0 : index
    %c0_14 = arith.constant 0 : index
    %23 = vector.load %arg5[%c0_12, %c0_13, %c0_14] : memref<2x4x16xf32, #tpu.memory_space<vmem>>, vector<2x4x16xf32>
    tpu.vector_store %arg5[%c0_12, %c0_13, %c0_14], %22 {strides = array<i32>} : memref<2x4x16xf32, #tpu.memory_space<vmem>>, vector<2x4x16xf32>,
    return
  }
  func.func @transform_0(%arg0: i32, %arg1: i32) -> (i32, i32, i32) {
    %c0_i32 = arith.constant 0 : i32
    %c0_i32_0 = arith.constant 0 : i32
    return %arg0, %c0_i32, %arg1 : i32, i32, i32
  }
  func.func @transform_1(%arg0: i32, %arg1: i32) -> (i32, i32, i32) {
    %c0_i32 = arith.constant 0 : i32
    %c0_i32_0 = arith.constant 0 : i32
    %c0_i32_1 = arith.constant 0 : i32
    %c0_i32_2 = arith.constant 0 : i32
    return %c0_i32, %c0_i32_0, %c0_i32_1 : i32, i32, i32
  }
  func.func @transform_2(%arg0: i32, %arg1: i32) -> (i32, i32, i32) {
    %c0_i32 = arith.constant 0 : i32
    %c0_i32_0 = arith.constant 0 : i32
    %c0_i32_1 = arith.constant 0 : i32
    %c0_i32_2 = arith.constant 0 : i32
    return %c0_i32, %c0_i32_0, %c0_i32_1 : i32, i32, i32
  }
  func.func @transform_3(%arg0: i32, %arg1: i32) -> (i32, i32, i32) {
    %c0_i32 = arith.constant 0 : i32
    %c0_i32_0 = arith.constant 0 : i32
    return %arg0, %c0_i32, %arg1 : i32, i32, i32
  }
}

</mosaic_0001>

<llo_original>
// kernel: tpu_custom_call.1
$region0: #{tpu_custom_call.1}
  #allocation0 [shape = 'u32[]', space=smem, size = 0x4, offset = 0x4, fixed_abs, tag = 'smem constant byte address 0x4 - core index']
  #allocation1 [shape = 'u32[144,128]{1,0:T(1,128)}', space=vmem, size = 0x12000, scoped, tag = 'internal scratch']
  %s0 = inlined_call_operand.vmem [shape: f32[2,4,16], index: 0, kind: input, shape index: {}]
  %s1 = inlined_call_operand.vmem [shape: f32[1,4,1], index: 1, kind: input, shape index: {}]
  %s2 = inlined_call_operand.vmem [shape: f32[1,4,1], index: 2, kind: input, shape index: {}]
  %s3 = inlined_call_operand.hbm [shape: f32[2,4,16], index: 3, kind: output, shape index: {}]
  %s4 = sld [smem:[#allocation0]]
  $region22: #{tpu_custom_call.1} parent=0
    _
  %s6 = ssub.s32 1, %s4
  %s7 = scalar_select 0, %s6, %s4
  $region1: #{tpu_custom_call.1} parent=0
    #allocation2 [shape = 'u8[4096]{0}', space=vmem, size = 0x1000, scoped, tag = 'output window, operand 0, single buffered']
    #allocation3 [shape = 's32[1]{0}', space=sflag, size = 0x4, scoped, tag = 'scoped memory for tpu_custom_call.1']
    %8 = vsyncpa [#allocation3], 0
    // Predicated region
    $region2: #{tpu_custom_call.1} parent=1 // pred_check
      _
    $region3: #{tpu_custom_call.1} parent=1 // pred_check_branch
      %10 = sbr.rel (0) target = $region5
    $region4: #{tpu_custom_call.1} parent=1 // pred_region
      _
    $region5: #{tpu_custom_call.1} parent=1 // pred_fallthru
      _
    // Predicated region
    $region6: #{tpu_custom_call.1} parent=1 // pred_check
      _
    $region7: #{tpu_custom_call.1} parent=1 // pred_check_branch
      %12 = sbr.rel (0) target = $region9
    $region8: #{tpu_custom_call.1} parent=1 // pred_region
      _
    $region9: #{tpu_custom_call.1} parent=1 // pred_fallthru
      _
    // Predicated region
    $region10: #{tpu_custom_call.1} parent=1 // pred_check
      _
    $region11: #{tpu_custom_call.1} parent=1 // pred_check_branch
      %14 = sbr.rel (0) target = $region13
    $region12: #{tpu_custom_call.1} parent=1 // pred_region
      _
    $region13: #{tpu_custom_call.1} parent=1 // pred_fallthru
      _
    %v15 = vld [vmem:[%s0] sm:$0xf]
    %v16 = vld [vmem:[%s0 + $0x4] sm:$0xf]
    %vm17 = vcmask 125952
    %v18 = vsel %vm17, %v15, 0.0
    %v19 = vrot.slane %v18, 4
    %v20 = vadd.f32 %v18, %v19
    %v21 = vrot.slane %v20, 2
    %v22 = vadd.f32 %v20, %v21
    %v23 = vrot.slane %v22, 1
    %v24 = vadd.f32 %v22, %v23
    %v25 = vsel %vm17, %v16, 0.0
    %v26 = vrot.slane %v25, 4
    %v27 = vadd.f32 %v25, %v26
    %v28 = vrot.slane %v27, 2
    %v29 = vadd.f32 %v27, %v28
    %v30 = vrot.slane %v29, 1
    %v31 = vadd.f32 %v29, %v30
    %v32 = vrcp.pop 4.0
    %v33 = vmul.f32 %v24, %v32
    %v34 = vmul.f32 %v31, %v32
    %v35 = vsub.f32 %v15, %v33
    %v36 = vsub.f32 %v16, %v34
    %v37 = vmul.f32 %v35, %v35
    %v38 = vmul.f32 %v36, %v36
    %v39 = vsel %vm17, %v37, 0.0
    %v40 = vrot.slane %v39, 4
    %v41 = vadd.f32 %v39, %v40
    %v42 = vrot.slane %v41, 2
    %v43 = vadd.f32 %v41, %v42
    %v44 = vrot.slane %v43, 1
    %v45 = vadd.f32 %v43, %v44
    %v46 = vsel %vm17, %v38, 0.0
    %v47 = vrot.slane %v46, 4
    %v48 = vadd.f32 %v46, %v47
    %v49 = vrot.slane %v48, 2
    %v50 = vadd.f32 %v48, %v49
    %v51 = vrot.slane %v50, 1
    %v52 = vadd.f32 %v50, %v51
    %v53 = vmul.f32 %v45, %v32
    %v54 = vmul.f32 %v52, %v32
    %v55 = vadd.f32 %v53, 1e-05
    %v56 = vadd.f32 %v54, 1e-05
    %v57 = vrsqrt.pop %v55
    %v58 = vrsqrt.pop %v56
    %v59 = vld [vmem:[%s1] sm:$0xf]
    %v60 = vld [vmem:[%s2] sm:$0xf]
    %v61 = vmul.f32 %v35, %v57
    %v62 = vmul.f32 %v36, %v58
    %64 = vset.pattern.permute.xlu0 0
    %65 = vperm.xlu0 %64, %v59
    %v66 = vpop.permute.xlu0 %65
    %v68 = vmul.f32 %v61, %v66
    %v69 = vmul.f32 %v62, %v66
    %71 = vset.pattern.permute.xlu0 0
    %72 = vperm.xlu0 %71, %v60
    %v73 = vpop.permute.xlu0 %72
    %v75 = vadd.f32 %v68, %v73
    %v76 = vadd.f32 %v69, %v73
    %77 = vst.msk [vmem:[#allocation2] sm:$0xf] %vm17, %v75
    %78 = vst.msk [vmem:[#allocation2 + $0x4] sm:$0xf] %vm17, %v76
    // Predicated region
    $region14: #{tpu_custom_call.1} parent=1 // pred_check
      _
    $region15: #{tpu_custom_call.1} parent=1 // pred_check_branch
      %80 = sbr.rel (0) target = $region17
    $region16: #{tpu_custom_call.1} parent=1 // pred_region
      %s82 = ssub.s32 128, 128
      %83 = vsyncadd [#allocation3], %s82
      %s84 = sshll.u32 [#allocation2], 4
      %s85 = int_to_ptr.vmem [resolvable:$true] %s84
      %90 = dma.vmem_to_hbm [thread:$0]  %s85, 128, %s3, [#allocation3], 64, 64, 4
    $region17: #{tpu_custom_call.1} parent=1 // pred_fallthru
      _
    // Predicated region
    $region18: #{tpu_custom_call.1} parent=1 // pred_check
      _
    $region19: #{tpu_custom_call.1} parent=1 // pred_check_branch
      %92 = sbr.rel (0) target = $region21
    $region20: #{tpu_custom_call.1} parent=1 // pred_region
      %93 = dma.done [#allocation3], 128
    $region21: #{tpu_custom_call.1} parent=1 // pred_fallthru
      _
    %94 = vsyncpa [#allocation3], 1

</llo_original>
